<compile_context>
chip_gen: v7x
topology: tpu7x:2x2x1
jax: 0.10.0
libtpu: 0.0.40
codegen_flags: <defaults>
</compile_context>

<pallas_src>
import functools
import math

import jax
import jax.numpy as jnp
from jax.experimental import pallas as pl
from jax.experimental.pallas import tpu as pltpu


def _cdiv(a: int, b: int) -> int:
    return -(-a // b)


def build_position_encoding(d_model: int,
                            max_timescale: float = 10000.0,
                            max_seq_len: int = 5000,
                            start_index: int = 0,
                            dtype=jnp.float32) -> jnp.ndarray:
    """Builds the (max_seq_len, d_model) sinusoidal table like the torch module.

    Build it once at setup in the *activation* dtype so the forward path never
    pays a per-call cast (perf review: hoist the cast out of the hot path).
    """
    assert d_model % 2 == 0, "d_model must be even (same limitation as the torch module)"
    position = jnp.arange(start_index, start_index + max_seq_len,
                          dtype=jnp.float32)[:, None]
    div_term = jnp.exp(
        jnp.arange(0, d_model, 2, dtype=jnp.float32) * (-math.log(max_timescale) / d_model)
    )
    pe = jnp.zeros((max_seq_len, d_model), dtype=jnp.float32)
    pe = pe.at[:, 0::2].set(jnp.sin(div_term * position))
    pe = pe.at[:, 1::2].set(jnp.cos(div_term * position))
    return pe.astype(dtype)


def _pe_add_flat_kernel(x_ref, pe_ref, o_ref, *, batch_tile: int, d_model: int):
    # x_ref / o_ref: (seq_tile, batch_tile * D)  lane-dense activation block
    # pe_ref:        (seq_tile, D)               positional-encoding block
    # Add PE per batch chunk via static, 128-lane-aligned slices (free ref views);
    # no concatenated / tiled PE temporary is ever materialized.
    pe = pe_ref[...]
    for b in range(batch_tile):
        lo = b * d_model
        o_ref[:, lo:lo + d_model] = x_ref[:, lo:lo + d_model] + pe


def _pe_add_3d_kernel(x_ref, pe_ref, o_ref):
    # Fallback (D % 128 != 0): x_ref/o_ref (seq_tile, B, D); pe_ref (seq_tile, 1, D).
    o_ref[...] = x_ref[...] + pe_ref[...]


def positional_encoding_forward(x: jnp.ndarray,
                                pe_table: jnp.ndarray,
                                *,
                                seq_tile: int | None = None,
                                batch_tile: int | None = None,
                                target_block_bytes: int = 4 << 20,
                                max_batch_unroll: int = 8,
                                vmem_cap_bytes: int = 48 << 20) -> jnp.ndarray:
    """x: (S, B, D) seq-first activations; pe_table: (max_seq_len, D) in x.dtype."""
    S, B, D = x.shape
    dtype = x.dtype
    itemsize = jnp.dtype(dtype).itemsize
    # Sublane packing multiple for this dtype (8 for f32, 16 for bf16, 32 for int8).
    sub = max(8, 8 * (4 // itemsize))

    # PE should already be built in the activation dtype (cast hoisted to setup).
    pe = pe_table if pe_table.dtype == dtype else pe_table.astype(dtype)

    if D % 128 == 0:
        # ------------------ main path: lane-dense (S, B*D) flatten ------------------
        auto_seq = seq_tile is None

        # Batch tile: keep each chunk lane-aligned (D % 128 == 0), bound block bytes,
        # and bound the static in-kernel unroll.
        if batch_tile is None:
            max_bt = max(1, target_block_bytes // (sub * D * itemsize))
            cap = min(B, max_bt, max_batch_unroll)
            batch_tile = 1
            for cand in range(cap, 0, -1):
                if B % cand == 0:
                    batch_tile = cand
                    break
        assert B % batch_tile == 0, "batch_tile must divide batch"

        row_bytes = batch_tile * D * itemsize
        if seq_tile is None:
            seq_tile = max(sub, (target_block_bytes // row_bytes) // sub * sub)
        else:
            seq_tile = max(sub, _cdiv(seq_tile, sub) * sub)

        if S <= sub:
            seq_tile = S  # full-extent block (allowed even if not a multiple of 8)
        else:
            seq_tile = min(seq_tile, _cdiv(S, sub) * sub)
            # v7x megacore: guarantee >= 2 steps on a "parallel" axis when the auto
            # tile would otherwise give a (1, 1) grid (cheap no-op on 1-TC chips).
            if auto_seq and _cdiv(S, seq_tile) == 1 and (B // batch_tile) == 1:
                seq_tile = max(sub, _cdiv(_cdiv(S, 2), sub) * sub)

        grid = (_cdiv(S, seq_tile), B // batch_tile)

        block_bytes = seq_tile * batch_tile * D * itemsize
        pe_bytes = seq_tile * D * itemsize
        vmem_limit = int(min(max(4 * block_bytes + 2 * pe_bytes + (1 << 20), 4 << 20),
                             vmem_cap_bytes))

        # Contiguous row-major reshape: free relabel, last dim becomes lane-dense B*D.
        x2 = x.reshape(S, B * D)

        out = pl.pallas_call(
            functools.partial(_pe_add_flat_kernel, batch_tile=batch_tile, d_model=D),
            out_shape=jax.ShapeDtypeStruct((S, B * D), dtype),
            grid_spec=pl.GridSpec(
                grid=grid,
                in_specs=[
                    pl.BlockSpec((seq_tile, batch_tile * D), lambda i, j: (i, j)),
                    # Full pe table passed in; index_map reads only the needed rows.
                    pl.BlockSpec((seq_tile, D), lambda i, j: (i, 0)),
                ],
                out_specs=pl.BlockSpec((seq_tile, batch_tile * D), lambda i, j: (i, j)),
            ),
            compiler_params=pltpu.CompilerParams(
                dimension_semantics=("parallel", "parallel"),
                vmem_limit_bytes=vmem_limit,
            ),
        )(x2, pe)
        return out.reshape(S, B, D)

    # -------- fallback path: D not a multiple of 128; keep 3-D blocks --------
    # TODO(synk): for wide unaligned d_model, pad d_model to a multiple of 128 at the
    # model level; masked partial stores make this path inherently slower.
    row_bytes = B * D * itemsize
    hard_cap = 8 << 20  # explicit byte cap so wide models never blow past VMEM
    if seq_tile is None:
        seq_tile = max(1, hard_cap // row_bytes)
    seq_tile = max(1, min(seq_tile, S))
    if seq_tile > 8:
        seq_tile = (seq_tile // 8) * 8

    pe3 = pe.reshape(pe.shape[0], 1, D)
    grid = (_cdiv(S, seq_tile),)
    block_bytes = seq_tile * B * D * itemsize
    vmem_limit = int(min(max(4 * block_bytes + 2 * seq_tile * D * itemsize + (1 << 20),
                             4 << 20), vmem_cap_bytes))

    return pl.pallas_call(
        _pe_add_3d_kernel,
        out_shape=jax.ShapeDtypeStruct((S, B, D), dtype),
        grid_spec=pl.GridSpec(
            grid=grid,
            in_specs=[
                pl.BlockSpec((seq_tile, B, D), lambda i: (i, 0, 0)),
                pl.BlockSpec((seq_tile, 1, D), lambda i: (i, 0, 0)),
            ],
            out_specs=pl.BlockSpec((seq_tile, B, D), lambda i: (i, 0, 0)),
        ),
        compiler_params=pltpu.CompilerParams(
            dimension_semantics=("parallel",),
            vmem_limit_bytes=vmem_limit,
        ),
    )(x, pe3)


if __name__ == "__main__":
    # Small, module-consistent shapes: seq=64, batch=2, d_model=128
    d_model = 128
    max_seq_len = 128
    seq_len = 64
    batch = 2

    key = jax.random.PRNGKey(0)
    k0, k1 = jax.random.split(key)
    x = jax.random.normal(k0, (seq_len, batch, d_model), dtype=jnp.float32)

    pe_table = build_position_encoding(d_model=d_model,
                                       max_timescale=10000.0,
                                       max_seq_len=max_seq_len,
                                       start_index=0)

    ref = x + pe_table[:seq_len][:, None, :]

    # 1) Explicit small seq tile -> multi-step pipelined grid (4, 1).
    out = jax.block_until_ready(positional_encoding_forward(x, pe_table, seq_tile=16))
    assert out.shape == x.shape and out.dtype == x.dtype
    assert jnp.allclose(out, ref, atol=1e-6), "mismatch vs reference (seq_tile=16)"

    # 2) Default (auto) tiling path (>= 2 grid steps, no host pad / output slice).
    out2 = jax.block_until_ready(positional_encoding_forward(x, pe_table))
    assert jnp.allclose(out2, ref, atol=1e-6), "mismatch vs reference (auto tiling)"

    # 3) Ragged sequence (S not a multiple of seq_tile): masked final block, no pad.
    xr = x[:50]
    refr = xr + pe_table[:50][:, None, :]
    outr = jax.block_until_ready(positional_encoding_forward(xr, pe_table, seq_tile=16))
    assert jnp.allclose(outr, refr, atol=1e-6), "mismatch vs reference (ragged seq)"

    # 4) bf16 activations with the PE table prebuilt in bf16 (cast hoisted to setup).
    pe_bf16 = build_position_encoding(d_model=d_model, max_seq_len=max_seq_len,
                                      dtype=jnp.bfloat16)
    xb = x.astype(jnp.bfloat16)
    outb = jax.block_until_ready(positional_encoding_forward(xb, pe_bf16, seq_tile=16))
    refb = xb + pe_bf16[:seq_len][:, None, :]
    assert outb.dtype == jnp.bfloat16
    assert jnp.allclose(outb.astype(jnp.float32), refb.astype(jnp.float32), atol=1e-2), \
        "mismatch vs reference (bf16)"

    # 5) Unaligned d_model fallback path (D % 128 != 0): 3-D blocks, capped bytes.
    d2 = 96
    pe2 = build_position_encoding(d_model=d2, max_seq_len=max_seq_len)
    x4 = jax.random.normal(k1, (40, 3, d2), dtype=jnp.float32)
    ref4 = x4 + pe2[:40][:, None, :]
    out4 = jax.block_until_ready(positional_encoding_forward(x4, pe2))
    assert jnp.allclose(out4, ref4, atol=1e-6), "mismatch vs reference (unaligned D)"

    print("KERNEL_OK")
</pallas_src>

<mosaic_0001>
module attributes {stable_mosaic.version = 11 : i64} {
  func.func @_pe_add_flat_kernel(%arg0: i32, %arg1: i32, %arg2: memref<16x256xf32, #tpu.memory_space<vmem>>, %arg3: memref<16x128xf32, #tpu.memory_space<vmem>>, %arg4: memref<16x256xf32, #tpu.memory_space<vmem>>) attributes {dimension_semantics = [#tpu.dimension_semantics<parallel>, #tpu.dimension_semantics<parallel>], iteration_bounds = array<i64: 4, 1>, scalar_prefetch = 0 : i64, scratch_operands = 0 : i64, tpu.core_type = #tpu.core_type<tc>, window_params = [{transform_indices = @transform_0, window_bounds = array<i64: 16, 256>}, {transform_indices = @transform_1, window_bounds = array<i64: 16, 128>}, {transform_indices = @transform_2, window_bounds = array<i64: 16, 256>}]} {
    %c0 = arith.constant 0 : index
    %c0_0 = arith.constant 0 : index
    %0 = vector.load %arg3[%c0, %c0_0] : memref<16x128xf32, #tpu.memory_space<vmem>>, vector<16x128xf32>
    %c0_1 = arith.constant 0 : index
    %c0_2 = arith.constant 0 : index
    %1 = vector.load %arg2[%c0_1, %c0_2] : memref<16x256xf32, #tpu.memory_space<vmem>>, vector<16x128xf32>
    %2 = arith.addf %1, %0 : vector<16x128xf32>
    %c0_3 = arith.constant 0 : index
    %c0_4 = arith.constant 0 : index
    %3 = vector.load %arg4[%c0_3, %c0_4] : memref<16x256xf32, #tpu.memory_space<vmem>>, vector<16x128xf32>
    tpu.vector_store %arg4[%c0_3, %c0_4], %2 {strides = array<i32>} : memref<16x256xf32, #tpu.memory_space<vmem>>, vector<16x128xf32>,
    %c0_5 = arith.constant 0 : index
    %c128 = arith.constant 128 : index
    %4 = vector.load %arg2[%c0_5, %c128] : memref<16x256xf32, #tpu.memory_space<vmem>>, vector<16x128xf32>
    %5 = arith.addf %4, %0 : vector<16x128xf32>
    %c0_6 = arith.constant 0 : index
    %c128_7 = arith.constant 128 : index
    %6 = vector.load %arg4[%c0_6, %c128_7] : memref<16x256xf32, #tpu.memory_space<vmem>>, vector<16x128xf32>
    tpu.vector_store %arg4[%c0_6, %c128_7], %5 {strides = array<i32>} : memref<16x256xf32, #tpu.memory_space<vmem>>, vector<16x128xf32>,
    return
  }
  func.func @transform_0(%arg0: i32, %arg1: i32) -> (i32, i32) {
    %c0_i32 = arith.constant 0 : i32
    return %arg0, %arg1 : i32, i32
  }
  func.func @transform_1(%arg0: i32, %arg1: i32) -> (i32, i32) {
    %c0_i32 = arith.constant 0 : i32
    %c0_i32_0 = arith.constant 0 : i32
    return %arg0, %c0_i32 : i32, i32
  }
  func.func @transform_2(%arg0: i32, %arg1: i32) -> (i32, i32) {
    %c0_i32 = arith.constant 0 : i32
    return %arg0, %arg1 : i32, i32
  }
}

</mosaic_0001>

<llo_original>
// kernel: tpu_custom_call.1
$region0: #{tpu_custom_call.1}
  #allocation0 [shape = 'u32[]', space=smem, size = 0x4, offset = 0x4, fixed_abs, tag = 'smem constant byte address 0x4 - core index']
  #allocation1 [shape = 'u32[144,128]{1,0:T(1,128)}', space=vmem, size = 0x12000, scoped, tag = 'internal scratch']
  %s0 = inlined_call_operand.hbm [shape: f32[64,256], index: 0, kind: input, shape index: {}]
  %s1 = inlined_call_operand.hbm [shape: f32[128,128], index: 1, kind: input, shape index: {}]
  %s2 = inlined_call_operand.hbm [shape: f32[64,256], index: 2, kind: output, shape index: {}]
  %s3 = sld [smem:[#allocation0]]
  $region49: #{tpu_custom_call.1} parent=0
    _
  %s5 = ssub.s32 1, %s3
  %s6 = scalar_select 0, %s5, %s3
  $region1: #{tpu_custom_call.1} parent=0
    #allocation2 [shape = 'u8[32768]{0}', space=vmem, size = 0x8000, scoped, tag = 'input window, operand 0']
    #allocation3 [shape = 's32[2]{0}', space=sflag, size = 0x8, scoped, tag = 'scoped memory for tpu_custom_call.1']
    #allocation4 [shape = 's32[2]{0}', space=sflag, size = 0x8, scoped, tag = 'scoped memory for tpu_custom_call.1']
    #allocation5 [shape = 'u8[16384]{0}', space=vmem, size = 0x4000, scoped, tag = 'input window, operand 1']
    #allocation6 [shape = 's32[2]{0}', space=sflag, size = 0x8, scoped, tag = 'scoped memory for tpu_custom_call.1']
    #allocation7 [shape = 'u8[32768]{0}', space=vmem, size = 0x8000, scoped, tag = 'output window, operand 0']
    %7 = vsyncpa [#allocation3], 0
    %s8 = scalar_lea.sflag [#allocation3], 1
    %9 = vsyncpa %s8, 0
    %10 = vsyncpa [#allocation6], 0
    %s11 = scalar_lea.sflag [#allocation6], 1
    %12 = vsyncpa %s11, 0
    %13 = vsyncpa [#allocation4], 0
    %s14 = scalar_lea.sflag [#allocation4], 1
    %15 = vsyncpa %s14, 0
    loop: start=0, step=1, limit=6
    $region2: #{tpu_custom_call.1} parent=1 // loop_pre_header
      _
    $region3: #{tpu_custom_call.1} parent=1 // loop_header
      %s17 = sphi 0, %s21
      %p18 = scmp.ge.s32.totalorder %s17, 6
      %s24 = sphi 0, %s36
      %s25 = sphi 0, %s32
      %s26 = sphi 0, %s24
      %s27 = sphi 0, %s25
      %s28 = sphi 0, %s26
      %s29 = sphi 0, %s27
      %s41 = sphi 0, %s43
      %s44 = sphi 0, %s41
      %s45 = sphi 0, %s44
      %s61 = sphi 0, %s45
      %s67 = sphi 0, %s69
      %s70 = sphi 0, %s67
      %s71 = sphi 0, %s70
      %s87 = sphi 0, %s71
      %s95 = sphi 0, %s97
      %s98 = sphi 0, %s95
      %s99 = sphi 0, %s98
      %s115 = sphi 0, %s99
    $region4: #{tpu_custom_call.1} parent=1 // loop_header_branch
      %20 = sbr.rel (%p18) target = $region8
    $region5: #{tpu_custom_call.1} parent=1 // loop_body
      %s22 = ssub.s32 %s17, 1
      %s23 = ssub.s32 %s17, 2
      %s30 = sadd.s32 1, %s25
      %p31 = scmp.ge.s32.totalorder %s30, 1
      %s32 = scalar_select %p31, 0, %s30
      %s33 = sadd.s32 1, %s24
      %s34 = scalar_select %p31, %s33, %s24
      %p35 = scmp.ge.s32.totalorder %s34, 4
      %s36 = scalar_select %p35, 0, %s34
      %s37 = ssub.s32 %s24, %s36
      %s38 = ssub.s32 %s25, %s32
      %s39 = sor.u32 %s37, %s38
      %p40 = scmp.eq.s32.totalorder %s39, 0
      %s42 = sadd.s32 %s41, 1
      %s43 = scalar_select %p40, %s41, %s42
      %p46 = pneg %p40
      %p47 = scmp.eq.s32.totalorder %s17, 3
      %p48 = por %p46, %p47
      %p49 = scmp.ne.s32.totalorder %s41, %s44
      %p50 = scmp.eq.s32.totalorder %s17, 0
      %p51 = por %p49, %p50
      %p52 = scmp.ne.s32.totalorder %s41, %s44
      %p53 = scmp.eq.s32.totalorder %s22, 3
      %p54 = por %p52, %p53
      %p55 = scmp.ne.s32.totalorder %s44, %s45
      %p56 = scmp.eq.s32.totalorder %s22, 0
      %p57 = por %p55, %p56
      %p58 = scmp.ne.s32.totalorder %s44, %s45
      %p59 = scmp.eq.s32.totalorder %s23, 3
      %p60 = por %p58, %p59
      %p62 = scmp.ne.s32.totalorder %s45, %s61
      %p63 = scmp.eq.s32.totalorder %s23, 0
      %p64 = por %p62, %p63
      %s65 = ssub.s32 %s24, %s36
      %p66 = scmp.eq.s32.totalorder %s65, 0
      %s68 = sadd.s32 %s67, 1
      %s69 = scalar_select %p66, %s67, %s68
      %p72 = pneg %p66
      %p73 = scmp.eq.s32.totalorder %s17, 3
      %p74 = por %p72, %p73
      %p75 = scmp.ne.s32.totalorder %s67, %s70
      %p76 = scmp.eq.s32.totalorder %s17, 0
      %p77 = por %p75, %p76
      %p78 = scmp.ne.s32.totalorder %s67, %s70
      %p79 = scmp.eq.s32.totalorder %s22, 3
      %p80 = por %p78, %p79
      %p81 = scmp.ne.s32.totalorder %s70, %s71
      %p82 = scmp.eq.s32.totalorder %s22, 0
      %p83 = por %p81, %p82
      %p84 = scmp.ne.s32.totalorder %s70, %s71
      %p85 = scmp.eq.s32.totalorder %s23, 3
      %p86 = por %p84, %p85
      %p88 = scmp.ne.s32.totalorder %s71, %s87
      %p89 = scmp.eq.s32.totalorder %s23, 0
      %p90 = por %p88, %p89
      %s91 = ssub.s32 %s24, %s36
      %s92 = ssub.s32 %s25, %s32
      %s93 = sor.u32 %s91, %s92
      %p94 = scmp.eq.s32.totalorder %s93, 0
      %s96 = sadd.s32 %s95, 1
      %s97 = scalar_select %p94, %s95, %s96
      %p100 = pneg %p94
      %p101 = scmp.eq.s32.totalorder %s17, 3
      %p102 = por %p100, %p101
      %p103 = scmp.ne.s32.totalorder %s95, %s98
      %p104 = scmp.eq.s32.totalorder %s17, 0
      %p105 = por %p103, %p104
      %p106 = scmp.ne.s32.totalorder %s95, %s98
      %p107 = scmp.eq.s32.totalorder %s22, 3
      %p108 = por %p106, %p107
      %p109 = scmp.ne.s32.totalorder %s98, %s99
      %p110 = scmp.eq.s32.totalorder %s22, 0
      %p111 = por %p109, %p110
      %p112 = scmp.ne.s32.totalorder %s98, %s99
      %p113 = scmp.eq.s32.totalorder %s23, 3
      %p114 = por %p112, %p113
      %p116 = scmp.ne.s32.totalorder %s99, %s115
      %p117 = scmp.eq.s32.totalorder %s23, 0
      %p118 = por %p116, %p117
      %p119 = scmp.le.s32.totalorder 1, %s17
      %p120 = scmp.lt.s32.totalorder %s17, 5
      %p121 = pnand %p119, %p120
      %p122 = pneg %p121
      // Predicated region
      $region9: #{tpu_custom_call.1} parent=5 // pred_check
        _
      $region10: #{tpu_custom_call.1} parent=5 // pred_check_branch
        %124 = sbr.rel (%p121) target = $region12
      $region11: #{tpu_custom_call.1} parent=5 // pred_region
        %s125 = ssub.s32 %s17, 1
      $region12: #{tpu_custom_call.1} parent=5 // pred_fallthru
        _
      %p126 = scmp.lt.s32.totalorder %s17, 4
      // Predicated region
      $region13: #{tpu_custom_call.1} parent=5 // pred_check
        %p127 = pneg %p126
      $region14: #{tpu_custom_call.1} parent=5 // pred_check_branch
        %129 = sbr.rel (%p127) target = $region16
      $region15: #{tpu_custom_call.1} parent=5 // pred_region
        // Predicated region
        $region17: #{tpu_custom_call.1} parent=15 // pred_check
          %p130 = pneg %p51
        $region18: #{tpu_custom_call.1} parent=15 // pred_check_branch
          %132 = sbr.rel (%p130) target = $region20
        $region19: #{tpu_custom_call.1} parent=15 // pred_region
          %s133 = sand.u32 %s41, 1
          %s134 = scalar_lea.sflag [#allocation3], %s133
          %s135 = sand.u32 %s41, 1
          %s136 = smul.addr %s135, 32
          %s137 = scalar_lea.vmem [#allocation2], %s136
          %s138 = smul.u32 2, %s24
          %s139 = smul.u32 2, %s25
          %s141 = ssub.s32 512, 512
          %142 = vsyncadd %s134, %s141
          %s143 = smul.addr %s138, 2
          %s144 = sadd.s32 %s139, %s143
          %s145 = smul.addr %s144, 128
          %s146 = scalar_lea.hbm %s0, %s145
          %s147 = sshll.u32 %s137, 4
          %s148 = int_to_ptr.vmem [resolvable:$true] %s147
          %153 = dma.hbm_to_vmem [thread:$0]  %s146, 512, %s148, %s134, 256, 256, 16
        $region20: #{tpu_custom_call.1} parent=15 // pred_fallthru
          _
        // Predicated region
        $region21: #{tpu_custom_call.1} parent=15 // pred_check
          %p154 = pneg %p77
        $region22: #{tpu_custom_call.1} parent=15 // pred_check_branch
          %156 = sbr.rel (%p154) target = $region24
        $region23: #{tpu_custom_call.1} parent=15 // pred_region
          %s157 = sand.u32 %s67, 1
          %s158 = scalar_lea.sflag [#allocation6], %s157
          %s159 = sand.u32 %s67, 1
          %s160 = smul.addr %s159, 16
          %s161 = scalar_lea.vmem [#allocation5], %s160
          %s162 = smul.u32 2, %s24
          %s164 = ssub.s32 256, 256
          %165 = vsyncadd %s158, %s164
          %s166 = smul.addr %s162, 128
          %s167 = scalar_lea.hbm %s1, %s166
          %s168 = sshll.u32 %s161, 4
          %s169 = int_to_ptr.vmem [resolvable:$true] %s168
          %174 = dma.hbm_to_vmem [thread:$0]  %s167, 256, %s169, %s158, 128, 128, 8
        $region24: #{tpu_custom_call.1} parent=15 // pred_fallthru
          _
      $region16: #{tpu_custom_call.1} parent=5 // pred_fallthru
        _
      %p175 = scmp.le.s32.totalorder 1, %s17
      %p176 = scmp.lt.s32.totalorder %s17, 5
      %p177 = pnand %p175, %p176
      %p178 = pneg %p177
      // Predicated region
      $region25: #{tpu_custom_call.1} parent=5 // pred_check
        _
      $region26: #{tpu_custom_call.1} parent=5 // pred_check_branch
        %180 = sbr.rel (%p177) target = $region28
      $region27: #{tpu_custom_call.1} parent=5 // pred_region
        %s181 = ssub.s32 %s17, 1
        %s182 = sand.u32 %s44, 1
        %s183 = scalar_lea.sflag [#allocation3], %s182
        %s184 = sand.u32 %s44, 1
        %s185 = smul.addr %s184, 32
        %s186 = scalar_lea.vmem [#allocation2], %s185
        // Predicated region
        $region29: #{tpu_custom_call.1} parent=27 // pred_check
          %p187 = pneg %p57
        $region30: #{tpu_custom_call.1} parent=27 // pred_check_branch
          %189 = sbr.rel (%p187) target = $region32
        $region31: #{tpu_custom_call.1} parent=27 // pred_region
          %190 = dma.done %s183, 512
        $region32: #{tpu_custom_call.1} parent=27 // pred_fallthru
          _
        %s191 = sand.u32 %s70, 1
        %s192 = scalar_lea.sflag [#allocation6], %s191
        %s193 = sand.u32 %s70, 1
        %s194 = smul.addr %s193, 16
        %s195 = scalar_lea.vmem [#allocation5], %s194
        // Predicated region
        $region33: #{tpu_custom_call.1} parent=27 // pred_check
          %p196 = pneg %p83
        $region34: #{tpu_custom_call.1} parent=27 // pred_check_branch
          %198 = sbr.rel (%p196) target = $region36
        $region35: #{tpu_custom_call.1} parent=27 // pred_region
          %199 = dma.done %s192, 256
        $region36: #{tpu_custom_call.1} parent=27 // pred_fallthru
          _
        %s200 = sand.u32 %s44, 1
        %s201 = scalar_lea.sflag [#allocation3], %s200
        %s202 = sand.u32 %s44, 1
        %s203 = smul.addr %s202, 32
        %s204 = scalar_lea.vmem [#allocation2], %s203
        %p205 = pneg %p57
        %p206 = pneg %p54
        %s207 = sand.u32 %s70, 1
        %s208 = scalar_lea.sflag [#allocation6], %s207
        %s209 = sand.u32 %s70, 1
        %s210 = smul.addr %s209, 16
        %s211 = scalar_lea.vmem [#allocation5], %s210
        %p212 = pneg %p83
        %p213 = pneg %p80
        %p214 = pneg %p111
        %p215 = pneg %p108
        %s216 = sand.u32 %s98, 1
        %s217 = scalar_lea.sflag [#allocation4], %s216
        %s218 = sand.u32 %s98, 1
        %s219 = smul.addr %s218, 32
        %s220 = scalar_lea.vmem [#allocation7], %s219
        %s221 = smul.u32 2, %s26
        %s222 = smul.u32 2, %s27
        %s223 = smul.u32 2, %s26
        %s224 = smul.u32 2, %s26
        %s225 = smul.u32 2, %s27
        %v226 = vld [vmem:[%s195] sm:$0xff]
        %v227 = vld [vmem:[%s195 + $0x8] sm:$0xff]
        %v228 = vld [vmem:[%s186] sm:$0xff]
        %v229 = vld [vmem:[%s186 + $0x10] sm:$0xff]
        %v230 = vadd.f32 %v228, %v226
        %v231 = vadd.f32 %v229, %v227
        %232 = vst [vmem:[%s220] sm:$0xff] %v230
        %233 = vst [vmem:[%s220 + $0x10] sm:$0xff] %v231
        %v234 = vld [vmem:[%s186 + $0x8] sm:$0xff]
        %v235 = vld [vmem:[%s186 + $0x18] sm:$0xff]
        %v236 = vadd.f32 %v234, %v226
        %v237 = vadd.f32 %v235, %v227
        %238 = vst [vmem:[%s220 + $0x8] sm:$0xff] %v236
        %239 = vst [vmem:[%s220 + $0x18] sm:$0xff] %v237
        %s240 = sand.u32 %s98, 1
        %s241 = scalar_lea.sflag [#allocation4], %s240
        %s242 = sand.u32 %s98, 1
        %s243 = smul.addr %s242, 32
        %s244 = scalar_lea.vmem [#allocation7], %s243
        // Predicated region
        $region37: #{tpu_custom_call.1} parent=27 // pred_check
          %p245 = pneg %p108
        $region38: #{tpu_custom_call.1} parent=27 // pred_check_branch
          %247 = sbr.rel (%p245) target = $region40
        $region39: #{tpu_custom_call.1} parent=27 // pred_region
          %s248 = smul.u32 2, %s26
          %s249 = smul.u32 2, %s27
          %s251 = ssub.s32 512, 512
          %252 = vsyncadd %s241, %s251
          %s253 = smul.addr %s248, 2
          %s254 = sadd.s32 %s249, %s253
          %s255 = smul.addr %s254, 128
          %s256 = scalar_lea.hbm %s2, %s255
          %s257 = sshll.u32 %s244, 4
          %s258 = int_to_ptr.vmem [resolvable:$true] %s257
          %263 = dma.vmem_to_hbm [thread:$0]  %s258, 512, %s256, %s241, 256, 256, 16
        $region40: #{tpu_custom_call.1} parent=27 // pred_fallthru
          _
      $region28: #{tpu_custom_call.1} parent=5 // pred_fallthru
        _
      %p264 = scmp.le.s32.totalorder 2, %s17
      // Predicated region
      $region41: #{tpu_custom_call.1} parent=5 // pred_check
        %p265 = pneg %p264
      $region42: #{tpu_custom_call.1} parent=5 // pred_check_branch
        %267 = sbr.rel (%p265) target = $region44
      $region43: #{tpu_custom_call.1} parent=5 // pred_region
        %s268 = ssub.s32 %s17, 2
        // Predicated region
        $region45: #{tpu_custom_call.1} parent=43 // pred_check
          %p269 = pneg %p114
        $region46: #{tpu_custom_call.1} parent=43 // pred_check_branch
          %271 = sbr.rel (%p269) target = $region48
        $region47: #{tpu_custom_call.1} parent=43 // pred_region
          %s272 = sand.u32 %s99, 1
          %s273 = scalar_lea.sflag [#allocation4], %s272
          %s274 = sand.u32 %s99, 1
          %s275 = smul.addr %s274, 32
          %s276 = scalar_lea.vmem [#allocation7], %s275
          %277 = dma.done %s273, 512
        $region48: #{tpu_custom_call.1} parent=43 // pred_fallthru
          _
      $region44: #{tpu_custom_call.1} parent=5 // pred_fallthru
        _
    $region6: #{tpu_custom_call.1} parent=1 // loop_footer
      %s21 = sadd.s32 1, %s17
    $region7: #{tpu_custom_call.1} parent=1 // loop_footer_branch
      %16 = sbr.rel target = $region3
    $region8: #{tpu_custom_call.1} parent=1 // loop_exit
      _
    %278 = vsyncpa [#allocation3], 1
    %s279 = scalar_lea.sflag [#allocation3], 1
    %280 = vsyncpa %s279, 1
    %281 = vsyncpa [#allocation6], 1
    %s282 = scalar_lea.sflag [#allocation6], 1
    %283 = vsyncpa %s282, 1
    %284 = vsyncpa [#allocation4], 1
    %s285 = scalar_lea.sflag [#allocation4], 1
    %286 = vsyncpa %s285, 1

</llo_original>
